<compile_context>
chip_gen: v7x
topology: tpu7x:2x2x1
jax: 0.10.0
libtpu: 0.0.40
codegen_flags: <defaults>
</compile_context>

<pallas_src>
import jax
import jax.numpy as jnp
import numpy as np
from jax.experimental import pallas as pl
from jax.experimental.pallas import tpu as pltpu

EPS = 1e-5


# ---------------- host-side tap masks (compile-time constants of H, W, dil) ----------------

def _tap_masks(H, W, dil, n_tile):
    """(10, N*H*W) f32: rows 0..8 are per-tap validity masks, row 9 is all-ones (shift row)."""
    hh, ww = np.meshgrid(np.arange(H), np.arange(W), indexing="ij")
    rows = []
    for kh in range(3):
        for kw in range(3):
            oh, ow = (kh - 1) * dil, (kw - 1) * dil
            valid = ((hh + oh >= 0) & (hh + oh < H) &
                     (ww + ow >= 0) & (ww + ow < W))
            rows.append(valid.reshape(-1).astype(np.float32))
    rows.append(np.ones(H * W, np.float32))
    m = np.stack(rows, axis=0)                    # (10, H*W)
    return jnp.asarray(np.tile(m, (1, n_tile)))   # (10, N*H*W)


# ---------------- fused Pallas kernel ----------------

def _make_fused_kernel(H, W, NHW, d1, d2):
    """Fused BlockTypeC kernel for fixed spatial size / dilations, whole batch in one block."""

    def kernel(x_ref, w1_ref, m1_ref, w2_ref, m2_ref, w3_ref, s3_ref, o_ref):
        def conv3x3_bn_relu(x, w_ref, m_ref, dil):
            # x: (Cin, NHW) f32; w_ref: (Cout, 9*Cin+1) with BN scale+shift folded;
            # m_ref: (10, NHW) tap masks (+ ones row).
            m = m_ref[...]
            rows = []
            for kh in range(3):
                for kw in range(3):
                    t = kh * 3 + kw
                    s = (kh - 1) * dil * W + (kw - 1) * dil      # flattened (lane) tap offset
                    if s == 0:
                        shifted = x
                    else:
                        # shifted[i] = x[(i + s) mod NHW]; wraps only hit masked positions.
                        shifted = pltpu.roll(x, shift=(-s) % NHW, axis=1)
                    rows.append(shifted * m[t:t + 1, :])
            rows.append(m[9:10, :])                               # ones row -> folded shift
            staged = jnp.concatenate(rows, axis=0)                # (9*Cin+1, NHW)
            return jnp.maximum(
                jnp.dot(w_ref[...], staged, preferred_element_type=jnp.float32), 0.0)

        x0 = x_ref[...].astype(jnp.float32)                       # (Cin, NHW)
        h1 = conv3x3_bn_relu(x0, w1_ref, m1_ref, d1)              # dilated 3x3 + BN + ReLU
        h2 = conv3x3_bn_relu(h1, w2_ref, m2_ref, d2)              # 3x3 + BN + ReLU
        y = jnp.dot(w3_ref[...], h2,                              # 1x1 conv
                    preferred_element_type=jnp.float32) + s3_ref[...]
        o_ref[...] = y.astype(o_ref.dtype)                        # (Cout, NHW), lane-dense store

    return kernel


def block_type_c_forward(params, x_nchw):
    """Fused BlockTypeC forward (eval-mode BN), NCHW in / NCHW out."""
    N, Cin, H, W = x_nchw.shape
    HW = H * W
    NHW = N * HW

    p1, p2, p3 = params["conv1"], params["conv2"], params["conv3"]
    assert p1["w"].shape[-1] == Cin and p2["w"].shape[-1] == Cin, \
        "BlockTypeC assumes conv1/conv2 are in_c -> in_c"
    Cout = p3["w"].shape[-1]

    # Fold conv bias + eval-mode BN into a stacked lane-dense weight (Cout, 9*Cin + 1):
    #   w' = w * gamma * rsqrt(var+eps), last column = (b - mean)*inv + beta.
    def fold(p):
        inv = p["gamma"] / jnp.sqrt(p["var"] + EPS)
        w = (p["w"] * inv[None, None, None, :])                 # (3,3,Cin,Cout)
        w = jnp.transpose(w, (3, 0, 1, 2)).reshape(Cin, 9 * Cin)  # tap-major, matches staging
        shift = (p["b"] - p["mean"]) * inv + p["beta"]
        return jnp.concatenate([w, shift[:, None]], axis=1)     # (Cin, 9*Cin+1)

    w1 = fold(p1)
    w2 = fold(p2)
    w3 = jnp.transpose(p3["w"][0, 0], (1, 0))                   # (Cout, Cin)
    s3 = p3["b"].reshape(Cout, 1)

    m1 = _tap_masks(H, W, 5, N)                                 # (10, NHW)
    m2 = _tap_masks(H, W, 1, N)

    # NCHW -> (Cin, N*HW): whole batch as one lane-dense slab, single grid step.
    x_flat = jnp.transpose(x_nchw.reshape(N, Cin, HW), (1, 0, 2)).reshape(Cin, NHW)
    x_flat = x_flat.astype(jnp.float32)

    kernel = _make_fused_kernel(H, W, NHW, 5, 1)
    out_flat = pl.pallas_call(
        kernel,
        out_shape=jax.ShapeDtypeStruct((Cout, NHW), jnp.float32),
        grid=(1,),
        in_specs=[
            pl.BlockSpec((Cin, NHW), lambda i: (0, 0)),
            pl.BlockSpec((Cin, 9 * Cin + 1), lambda i: (0, 0)),
            pl.BlockSpec((10, NHW), lambda i: (0, 0)),
            pl.BlockSpec((Cin, 9 * Cin + 1), lambda i: (0, 0)),
            pl.BlockSpec((10, NHW), lambda i: (0, 0)),
            pl.BlockSpec((Cout, Cin), lambda i: (0, 0)),
            pl.BlockSpec((Cout, 1), lambda i: (0, 0)),
        ],
        out_specs=pl.BlockSpec((Cout, NHW), lambda i: (0, 0)),
    )(x_flat, w1, m1, w2, m2, w3, s3)

    # (Cout, N*HW) -> NCHW
    return jnp.transpose(out_flat.reshape(Cout, N, HW), (1, 0, 2)).reshape(N, Cout, H, W)


# ---------------- parameter construction (deterministic, synthetic) ----------------

def _conv_params(key, kh, kw, cin, cout):
    kw_key, kb_key = jax.random.split(key)
    fan_in = cin * kh * kw
    bound = 1.0 / np.sqrt(fan_in)
    w = jax.random.uniform(kw_key, (kh, kw, cin, cout), jnp.float32, -bound, bound)
    b = jax.random.uniform(kb_key, (cout,), jnp.float32, -bound, bound)
    return w, b


def _bn_params(key, c):
    k1, k2, k3, k4 = jax.random.split(key, 4)
    gamma = 1.0 + 0.1 * jax.random.normal(k1, (c,), jnp.float32)
    beta = 0.1 * jax.random.normal(k2, (c,), jnp.float32)
    mean = 0.1 * jax.random.normal(k3, (c,), jnp.float32)
    var = jax.random.uniform(k4, (c,), jnp.float32, 0.5, 1.5)
    return gamma, beta, mean, var


def make_block_type_c_params(key, in_c, out_c):
    k1, k2, k3, k4, k5 = jax.random.split(key, 5)
    w1, b1 = _conv_params(k1, 3, 3, in_c, in_c)
    g1, be1, m1, v1 = _bn_params(k2, in_c)
    w2, b2 = _conv_params(k3, 3, 3, in_c, in_c)
    g2, be2, m2, v2 = _bn_params(k4, in_c)
    w3, b3 = _conv_params(k5, 1, 1, in_c, out_c)
    return {
        "conv1": dict(w=w1, b=b1, gamma=g1, beta=be1, mean=m1, var=v1),
        "conv2": dict(w=w2, b=b2, gamma=g2, beta=be2, mean=m2, var=v2),
        "conv3": dict(w=w3, b=b3),
    }


# ---------------- pure-JAX reference (mirrors the PyTorch module, eval-mode BN) ----------------

def block_type_c_reference(params, x_nchw):
    def conv(x, w, b, dil):
        pad = dil * (w.shape[0] // 2)
        y = jax.lax.conv_general_dilated(
            x, w, window_strides=(1, 1),
            padding=[(pad, pad), (pad, pad)],
            rhs_dilation=(dil, dil),
            dimension_numbers=("NCHW", "HWIO", "NCHW"))
        return y + b[None, :, None, None]

    def bn_relu(y, p):
        inv = p["gamma"] / jnp.sqrt(p["var"] + EPS)
        y = (y - p["mean"][None, :, None, None]) * inv[None, :, None, None] \
            + p["beta"][None, :, None, None]
        return jnp.maximum(y, 0.0)

    x = bn_relu(conv(x_nchw, params["conv1"]["w"], params["conv1"]["b"], 5), params["conv1"])
    x = bn_relu(conv(x, params["conv2"]["w"], params["conv2"]["b"], 1), params["conv2"])
    x = conv(x, params["conv3"]["w"], params["conv3"]["b"], 1)
    return x


if __name__ == "__main__":
    key = jax.random.PRNGKey(0)
    k_param, k_x = jax.random.split(key)

    N, in_c, out_c, H, W = 2, 4, 8, 16, 16
    params = make_block_type_c_params(k_param, in_c, out_c)
    x = jax.random.normal(k_x, (N, in_c, H, W), jnp.float32)

    out = block_type_c_forward(params, x)
    out = jax.block_until_ready(out)

    ref = jax.block_until_ready(block_type_c_reference(params, x))
    assert out.shape == (N, out_c, H, W), out.shape
    np.testing.assert_allclose(np.asarray(out), np.asarray(ref), atol=2e-4, rtol=2e-4)

    print("KERNEL_OK")
</pallas_src>

<mosaic_0001>
module attributes {stable_mosaic.version = 11 : i64} {
  func.func @kernel(%arg0: i32, %arg1: memref<4x512xf32, #tpu.memory_space<vmem>>, %arg2: memref<4x37xf32, #tpu.memory_space<vmem>>, %arg3: memref<10x512xf32, #tpu.memory_space<vmem>>, %arg4: memref<4x37xf32, #tpu.memory_space<vmem>>, %arg5: memref<10x512xf32, #tpu.memory_space<vmem>>, %arg6: memref<8x4xf32, #tpu.memory_space<vmem>>, %arg7: memref<8x1xf32, #tpu.memory_space<vmem>>, %arg8: memref<8x512xf32, #tpu.memory_space<vmem>>) attributes {dimension_semantics = [#tpu.dimension_semantics<arbitrary>], iteration_bounds = array<i64: 1>, scalar_prefetch = 0 : i64, scratch_operands = 0 : i64, tpu.core_type = #tpu.core_type<tc>, window_params = [{pipeline_mode = #tpu.pipeline_mode<synchronous>, transform_indices = @transform_0, window_bounds = array<i64: 4, 512>}, {pipeline_mode = #tpu.pipeline_mode<synchronous>, transform_indices = @transform_1, window_bounds = array<i64: 4, 37>}, {pipeline_mode = #tpu.pipeline_mode<synchronous>, transform_indices = @transform_2, window_bounds = array<i64: 10, 512>}, {pipeline_mode = #tpu.pipeline_mode<synchronous>, transform_indices = @transform_3, window_bounds = array<i64: 4, 37>}, {pipeline_mode = #tpu.pipeline_mode<synchronous>, transform_indices = @transform_4, window_bounds = array<i64: 10, 512>}, {pipeline_mode = #tpu.pipeline_mode<synchronous>, transform_indices = @transform_5, window_bounds = array<i64: 8, 4>}, {pipeline_mode = #tpu.pipeline_mode<synchronous>, transform_indices = @transform_6, window_bounds = array<i64: 8, 1>}, {pipeline_mode = #tpu.pipeline_mode<synchronous>, transform_indices = @transform_7, window_bounds = array<i64: 8, 512>}]} {
    %c0 = arith.constant 0 : index
    %c0_0 = arith.constant 0 : index
    %0 = vector.load %arg1[%c0, %c0_0] : memref<4x512xf32, #tpu.memory_space<vmem>>, vector<4x512xf32>
    %c0_1 = arith.constant 0 : index
    %c0_2 = arith.constant 0 : index
    %1 = vector.load %arg3[%c0_1, %c0_2] : memref<10x512xf32, #tpu.memory_space<vmem>>, vector<10x512xf32>
    %c85_i32 = arith.constant 85 : i32
    %2 = tpu.dynamic_rotate %0 by %c85_i32 dim 1 : vector<4x512xf32>, i32 -> vector<4x512xf32>
    %3 = vector.extract_strided_slice %1 {offsets = [0, 0], sizes = [1, 512], strides = [1, 1]} : vector<10x512xf32> to vector<1x512xf32>
    %4 = vector.broadcast %3 : vector<1x512xf32> to vector<4x512xf32>
    %5 = arith.mulf %2, %4 : vector<4x512xf32>
    %c80_i32 = arith.constant 80 : i32
    %6 = tpu.dynamic_rotate %0 by %c80_i32 dim 1 : vector<4x512xf32>, i32 -> vector<4x512xf32>
    %7 = vector.extract_strided_slice %1 {offsets = [1, 0], sizes = [1, 512], strides = [1, 1]} : vector<10x512xf32> to vector<1x512xf32>
    %8 = vector.broadcast %7 : vector<1x512xf32> to vector<4x512xf32>
    %9 = arith.mulf %6, %8 : vector<4x512xf32>
    %c75_i32 = arith.constant 75 : i32
    %10 = tpu.dynamic_rotate %0 by %c75_i32 dim 1 : vector<4x512xf32>, i32 -> vector<4x512xf32>
    %11 = vector.extract_strided_slice %1 {offsets = [2, 0], sizes = [1, 512], strides = [1, 1]} : vector<10x512xf32> to vector<1x512xf32>
    %12 = vector.broadcast %11 : vector<1x512xf32> to vector<4x512xf32>
    %13 = arith.mulf %10, %12 : vector<4x512xf32>
    %c5_i32 = arith.constant 5 : i32
    %14 = tpu.dynamic_rotate %0 by %c5_i32 dim 1 : vector<4x512xf32>, i32 -> vector<4x512xf32>
    %15 = vector.extract_strided_slice %1 {offsets = [3, 0], sizes = [1, 512], strides = [1, 1]} : vector<10x512xf32> to vector<1x512xf32>
    %16 = vector.broadcast %15 : vector<1x512xf32> to vector<4x512xf32>
    %17 = arith.mulf %14, %16 : vector<4x512xf32>
    %18 = vector.extract_strided_slice %1 {offsets = [4, 0], sizes = [1, 512], strides = [1, 1]} : vector<10x512xf32> to vector<1x512xf32>
    %19 = vector.broadcast %18 : vector<1x512xf32> to vector<4x512xf32>
    %20 = arith.mulf %0, %19 : vector<4x512xf32>
    %c507_i32 = arith.constant 507 : i32
    %21 = tpu.dynamic_rotate %0 by %c507_i32 dim 1 : vector<4x512xf32>, i32 -> vector<4x512xf32>
    %22 = vector.extract_strided_slice %1 {offsets = [5, 0], sizes = [1, 512], strides = [1, 1]} : vector<10x512xf32> to vector<1x512xf32>
    %23 = vector.broadcast %22 : vector<1x512xf32> to vector<4x512xf32>
    %24 = arith.mulf %21, %23 : vector<4x512xf32>
    %c437_i32 = arith.constant 437 : i32
    %25 = tpu.dynamic_rotate %0 by %c437_i32 dim 1 : vector<4x512xf32>, i32 -> vector<4x512xf32>
    %26 = vector.extract_strided_slice %1 {offsets = [6, 0], sizes = [1, 512], strides = [1, 1]} : vector<10x512xf32> to vector<1x512xf32>
    %27 = vector.broadcast %26 : vector<1x512xf32> to vector<4x512xf32>
    %28 = arith.mulf %25, %27 : vector<4x512xf32>
    %c432_i32 = arith.constant 432 : i32
    %29 = tpu.dynamic_rotate %0 by %c432_i32 dim 1 : vector<4x512xf32>, i32 -> vector<4x512xf32>
    %30 = vector.extract_strided_slice %1 {offsets = [7, 0], sizes = [1, 512], strides = [1, 1]} : vector<10x512xf32> to vector<1x512xf32>
    %31 = vector.broadcast %30 : vector<1x512xf32> to vector<4x512xf32>
    %32 = arith.mulf %29, %31 : vector<4x512xf32>
    %c427_i32 = arith.constant 427 : i32
    %33 = tpu.dynamic_rotate %0 by %c427_i32 dim 1 : vector<4x512xf32>, i32 -> vector<4x512xf32>
    %34 = vector.extract_strided_slice %1 {offsets = [8, 0], sizes = [1, 512], strides = [1, 1]} : vector<10x512xf32> to vector<1x512xf32>
    %35 = vector.broadcast %34 : vector<1x512xf32> to vector<4x512xf32>
    %36 = arith.mulf %33, %35 : vector<4x512xf32>
    %37 = vector.extract_strided_slice %1 {offsets = [9, 0], sizes = [1, 512], strides = [1, 1]} : vector<10x512xf32> to vector<1x512xf32>
    %38 = tpu.concatenate %5, %9, %13, %17, %20, %24, %28, %32, %36, %37 in 0 : vector<4x512xf32>, vector<4x512xf32>, vector<4x512xf32>, vector<4x512xf32>, vector<4x512xf32>, vector<4x512xf32>, vector<4x512xf32>, vector<4x512xf32>, vector<4x512xf32>, vector<1x512xf32> -> vector<37x512xf32>
    %c0_3 = arith.constant 0 : index
    %c0_4 = arith.constant 0 : index
    %39 = vector.load %arg2[%c0_3, %c0_4] : memref<4x37xf32, #tpu.memory_space<vmem>>, vector<4x37xf32>
    %cst = arith.constant dense<0.000000e+00> : vector<4x512xf32>
    %40 = tpu.matmul %39, %38, %cst {dimension_numbers = #tpu.dot_dimension_numbers<[1], [0], [0], [1], [0, 0, 1, 1], [], []>} : vector<4x37xf32>, vector<37x512xf32>, vector<4x512xf32> -> vector<4x512xf32>
    %cst_5 = arith.constant 0.000000e+00 : f32
    %41 = vector.broadcast %cst_5 : f32 to vector<4x512xf32>
    %42 = arith.maximumf %40, %41 : vector<4x512xf32>
    %c0_6 = arith.constant 0 : index
    %c0_7 = arith.constant 0 : index
    %43 = vector.load %arg5[%c0_6, %c0_7] : memref<10x512xf32, #tpu.memory_space<vmem>>, vector<10x512xf32>
    %c17_i32 = arith.constant 17 : i32
    %44 = tpu.dynamic_rotate %42 by %c17_i32 dim 1 : vector<4x512xf32>, i32 -> vector<4x512xf32>
    %45 = vector.extract_strided_slice %43 {offsets = [0, 0], sizes = [1, 512], strides = [1, 1]} : vector<10x512xf32> to vector<1x512xf32>
    %46 = vector.broadcast %45 : vector<1x512xf32> to vector<4x512xf32>
    %47 = arith.mulf %44, %46 : vector<4x512xf32>
    %c16_i32 = arith.constant 16 : i32
    %48 = tpu.dynamic_rotate %42 by %c16_i32 dim 1 : vector<4x512xf32>, i32 -> vector<4x512xf32>
    %49 = vector.extract_strided_slice %43 {offsets = [1, 0], sizes = [1, 512], strides = [1, 1]} : vector<10x512xf32> to vector<1x512xf32>
    %50 = vector.broadcast %49 : vector<1x512xf32> to vector<4x512xf32>
    %51 = arith.mulf %48, %50 : vector<4x512xf32>
    %c15_i32 = arith.constant 15 : i32
    %52 = tpu.dynamic_rotate %42 by %c15_i32 dim 1 : vector<4x512xf32>, i32 -> vector<4x512xf32>
    %53 = vector.extract_strided_slice %43 {offsets = [2, 0], sizes = [1, 512], strides = [1, 1]} : vector<10x512xf32> to vector<1x512xf32>
    %54 = vector.broadcast %53 : vector<1x512xf32> to vector<4x512xf32>
    %55 = arith.mulf %52, %54 : vector<4x512xf32>
    %c1_i32 = arith.constant 1 : i32
    %56 = tpu.dynamic_rotate %42 by %c1_i32 dim 1 : vector<4x512xf32>, i32 -> vector<4x512xf32>
    %57 = vector.extract_strided_slice %43 {offsets = [3, 0], sizes = [1, 512], strides = [1, 1]} : vector<10x512xf32> to vector<1x512xf32>
    %58 = vector.broadcast %57 : vector<1x512xf32> to vector<4x512xf32>
    %59 = arith.mulf %56, %58 : vector<4x512xf32>
    %60 = vector.extract_strided_slice %43 {offsets = [4, 0], sizes = [1, 512], strides = [1, 1]} : vector<10x512xf32> to vector<1x512xf32>
    %61 = vector.broadcast %60 : vector<1x512xf32> to vector<4x512xf32>
    %62 = arith.mulf %42, %61 : vector<4x512xf32>
    %c511_i32 = arith.constant 511 : i32
    %63 = tpu.dynamic_rotate %42 by %c511_i32 dim 1 : vector<4x512xf32>, i32 -> vector<4x512xf32>
    %64 = vector.extract_strided_slice %43 {offsets = [5, 0], sizes = [1, 512], strides = [1, 1]} : vector<10x512xf32> to vector<1x512xf32>
    %65 = vector.broadcast %64 : vector<1x512xf32> to vector<4x512xf32>
    %66 = arith.mulf %63, %65 : vector<4x512xf32>
    %c497_i32 = arith.constant 497 : i32
    %67 = tpu.dynamic_rotate %42 by %c497_i32 dim 1 : vector<4x512xf32>, i32 -> vector<4x512xf32>
    %68 = vector.extract_strided_slice %43 {offsets = [6, 0], sizes = [1, 512], strides = [1, 1]} : vector<10x512xf32> to vector<1x512xf32>
    %69 = vector.broadcast %68 : vector<1x512xf32> to vector<4x512xf32>
    %70 = arith.mulf %67, %69 : vector<4x512xf32>
    %c496_i32 = arith.constant 496 : i32
    %71 = tpu.dynamic_rotate %42 by %c496_i32 dim 1 : vector<4x512xf32>, i32 -> vector<4x512xf32>
    %72 = vector.extract_strided_slice %43 {offsets = [7, 0], sizes = [1, 512], strides = [1, 1]} : vector<10x512xf32> to vector<1x512xf32>
    %73 = vector.broadcast %72 : vector<1x512xf32> to vector<4x512xf32>
    %74 = arith.mulf %71, %73 : vector<4x512xf32>
    %c495_i32 = arith.constant 495 : i32
    %75 = tpu.dynamic_rotate %42 by %c495_i32 dim 1 : vector<4x512xf32>, i32 -> vector<4x512xf32>
    %76 = vector.extract_strided_slice %43 {offsets = [8, 0], sizes = [1, 512], strides = [1, 1]} : vector<10x512xf32> to vector<1x512xf32>
    %77 = vector.broadcast %76 : vector<1x512xf32> to vector<4x512xf32>
    %78 = arith.mulf %75, %77 : vector<4x512xf32>
    %79 = vector.extract_strided_slice %43 {offsets = [9, 0], sizes = [1, 512], strides = [1, 1]} : vector<10x512xf32> to vector<1x512xf32>
    %80 = tpu.concatenate %47, %51, %55, %59, %62, %66, %70, %74, %78, %79 in 0 : vector<4x512xf32>, vector<4x512xf32>, vector<4x512xf32>, vector<4x512xf32>, vector<4x512xf32>, vector<4x512xf32>, vector<4x512xf32>, vector<4x512xf32>, vector<4x512xf32>, vector<1x512xf32> -> vector<37x512xf32>
    %c0_8 = arith.constant 0 : index
    %c0_9 = arith.constant 0 : index
    %81 = vector.load %arg4[%c0_8, %c0_9] : memref<4x37xf32, #tpu.memory_space<vmem>>, vector<4x37xf32>
    %cst_10 = arith.constant dense<0.000000e+00> : vector<4x512xf32>
    %82 = tpu.matmul %81, %80, %cst_10 {dimension_numbers = #tpu.dot_dimension_numbers<[1], [0], [0], [1], [0, 0, 1, 1], [], []>} : vector<4x37xf32>, vector<37x512xf32>, vector<4x512xf32> -> vector<4x512xf32>
    %cst_11 = arith.constant 0.000000e+00 : f32
    %83 = vector.broadcast %cst_11 : f32 to vector<4x512xf32>
    %84 = arith.maximumf %82, %83 : vector<4x512xf32>
    %c0_12 = arith.constant 0 : index
    %c0_13 = arith.constant 0 : index
    %85 = vector.load %arg6[%c0_12, %c0_13] : memref<8x4xf32, #tpu.memory_space<vmem>>, vector<8x4xf32>
    %cst_14 = arith.constant dense<0.000000e+00> : vector<8x512xf32>
    %86 = tpu.matmul %85, %84, %cst_14 {dimension_numbers = #tpu.dot_dimension_numbers<[1], [0], [0], [1], [0, 0, 1, 1], [], []>} : vector<8x4xf32>, vector<4x512xf32>, vector<8x512xf32> -> vector<8x512xf32>
    %c0_15 = arith.constant 0 : index
    %c0_16 = arith.constant 0 : index
    %87 = vector.load %arg7[%c0_15, %c0_16] : memref<8x1xf32, #tpu.memory_space<vmem>>, vector<8x1xf32>
    %88 = vector.broadcast %87 : vector<8x1xf32> to vector<8x512xf32>
    %89 = arith.addf %86, %88 : vector<8x512xf32>
    %c0_17 = arith.constant 0 : index
    %c0_18 = arith.constant 0 : index
    %90 = vector.load %arg8[%c0_17, %c0_18] : memref<8x512xf32, #tpu.memory_space<vmem>>, vector<8x512xf32>
    tpu.vector_store %arg8[%c0_17, %c0_18], %89 {strides = array<i32>} : memref<8x512xf32, #tpu.memory_space<vmem>>, vector<8x512xf32>,
    return
  }
  func.func @transform_0(%arg0: i32) -> (i32, i32) {
    %c0_i32 = arith.constant 0 : i32
    %c0_i32_0 = arith.constant 0 : i32
    %c0_i32_1 = arith.constant 0 : i32
    return %c0_i32, %c0_i32_0 : i32, i32
  }
  func.func @transform_1(%arg0: i32) -> (i32, i32) {
    %c0_i32 = arith.constant 0 : i32
    %c0_i32_0 = arith.constant 0 : i32
    %c0_i32_1 = arith.constant 0 : i32
    return %c0_i32, %c0_i32_0 : i32, i32
  }
  func.func @transform_2(%arg0: i32) -> (i32, i32) {
    %c0_i32 = arith.constant 0 : i32
    %c0_i32_0 = arith.constant 0 : i32
    %c0_i32_1 = arith.constant 0 : i32
    return %c0_i32, %c0_i32_0 : i32, i32
  }
  func.func @transform_3(%arg0: i32) -> (i32, i32) {
    %c0_i32 = arith.constant 0 : i32
    %c0_i32_0 = arith.constant 0 : i32
    %c0_i32_1 = arith.constant 0 : i32
    return %c0_i32, %c0_i32_0 : i32, i32
  }
  func.func @transform_4(%arg0: i32) -> (i32, i32) {
    %c0_i32 = arith.constant 0 : i32
    %c0_i32_0 = arith.constant 0 : i32
    %c0_i32_1 = arith.constant 0 : i32
    return %c0_i32, %c0_i32_0 : i32, i32
  }
  func.func @transform_5(%arg0: i32) -> (i32, i32) {
    %c0_i32 = arith.constant 0 : i32
    %c0_i32_0 = arith.constant 0 : i32
    %c0_i32_1 = arith.constant 0 : i32
    return %c0_i32, %c0_i32_0 : i32, i32
  }
  func.func @transform_6(%arg0: i32) -> (i32, i32) {
    %c0_i32 = arith.constant 0 : i32
    %c0_i32_0 = arith.constant 0 : i32
    %c0_i32_1 = arith.constant 0 : i32
    return %c0_i32, %c0_i32_0 : i32, i32
  }
  func.func @transform_7(%arg0: i32) -> (i32, i32) {
    %c0_i32 = arith.constant 0 : i32
    %c0_i32_0 = arith.constant 0 : i32
    %c0_i32_1 = arith.constant 0 : i32
    return %c0_i32, %c0_i32_0 : i32, i32
  }
}

</mosaic_0001>

<llo_original>
// kernel: tpu_custom_call.1
$region0: #{tpu_custom_call.1}
  #allocation0 [shape = 'u32[]', space=smem, size = 0x4, offset = 0x4, fixed_abs, tag = 'smem constant byte address 0x4 - core index']
  #allocation1 [shape = 'u32[144,128]{1,0:T(1,128)}', space=vmem, size = 0x12000, scoped, tag = 'internal scratch']
  %s0 = inlined_call_operand.vmem [shape: f32[4,512], index: 0, kind: input, shape index: {}]
  %s1 = inlined_call_operand.vmem [shape: f32[4,37], index: 1, kind: input, shape index: {}]
  %s2 = inlined_call_operand.hbm [shape: f32[10,512], index: 2, kind: input, shape index: {}]
  %s3 = inlined_call_operand.vmem [shape: f32[4,37], index: 3, kind: input, shape index: {}]
  %s4 = inlined_call_operand.hbm [shape: f32[10,512], index: 4, kind: input, shape index: {}]
  %s5 = inlined_call_operand.vmem [shape: f32[8,4], index: 5, kind: input, shape index: {}]
  %s6 = inlined_call_operand.vmem [shape: f32[8,1], index: 6, kind: input, shape index: {}]
  %s7 = inlined_call_operand.hbm [shape: f32[8,512], index: 7, kind: output, shape index: {}]
  %s8 = sld [smem:[#allocation0]]
  $region46: #{tpu_custom_call.1} parent=0
    _
  %s10 = ssub.s32 1, %s8
  %s11 = scalar_select 0, %s10, %s8
  $region1: #{tpu_custom_call.1} parent=0
    #allocation2 [shape = 'u8[32768]{0}', space=vmem, size = 0x8000, scoped, tag = 'input window, operand 2, single buffered']
    #allocation3 [shape = 's32[1]{0}', space=sflag, size = 0x4, scoped, tag = 'scoped memory for tpu_custom_call.1']
    #allocation4 [shape = 's32[1]{0}', space=sflag, size = 0x4, scoped, tag = 'scoped memory for tpu_custom_call.1']
    #allocation5 [shape = 'u8[32768]{0}', space=vmem, size = 0x8000, scoped, tag = 'input window, operand 4, single buffered']
    #allocation6 [shape = 's32[1]{0}', space=sflag, size = 0x4, scoped, tag = 'scoped memory for tpu_custom_call.1']
    #allocation7 [shape = 'u8[16384]{0}', space=vmem, size = 0x4000, scoped, tag = 'output window, operand 0, single buffered']
    %12 = vsyncpa [#allocation3], 0
    %13 = vsyncpa [#allocation6], 0
    %14 = vsyncpa [#allocation4], 0
    // Predicated region
    $region2: #{tpu_custom_call.1} parent=1 // pred_check
      _
    $region3: #{tpu_custom_call.1} parent=1 // pred_check_branch
      %16 = sbr.rel (0) target = $region5
    $region4: #{tpu_custom_call.1} parent=1 // pred_region
      _
    $region5: #{tpu_custom_call.1} parent=1 // pred_fallthru
      _
    // Predicated region
    $region6: #{tpu_custom_call.1} parent=1 // pred_check
      _
    $region7: #{tpu_custom_call.1} parent=1 // pred_check_branch
      %18 = sbr.rel (0) target = $region9
    $region8: #{tpu_custom_call.1} parent=1 // pred_region
      _
    $region9: #{tpu_custom_call.1} parent=1 // pred_fallthru
      _
    // Predicated region
    $region10: #{tpu_custom_call.1} parent=1 // pred_check
      _
    $region11: #{tpu_custom_call.1} parent=1 // pred_check_branch
      %20 = sbr.rel (0) target = $region13
    $region12: #{tpu_custom_call.1} parent=1 // pred_region
      %s22 = ssub.s32 1024, 1024
      %23 = vsyncadd [#allocation3], %s22
      %s24 = sshll.u32 [#allocation2], 4
      %s25 = int_to_ptr.vmem [resolvable:$true] %s24
      %30 = dma.hbm_to_vmem [thread:$0]  %s2, 1024, %s25, [#allocation3], 512, 512, 32
    $region13: #{tpu_custom_call.1} parent=1 // pred_fallthru
      _
    // Predicated region
    $region14: #{tpu_custom_call.1} parent=1 // pred_check
      _
    $region15: #{tpu_custom_call.1} parent=1 // pred_check_branch
      %32 = sbr.rel (0) target = $region17
    $region16: #{tpu_custom_call.1} parent=1 // pred_region
      _
    $region17: #{tpu_custom_call.1} parent=1 // pred_fallthru
      _
    // Predicated region
    $region18: #{tpu_custom_call.1} parent=1 // pred_check
      _
    $region19: #{tpu_custom_call.1} parent=1 // pred_check_branch
      %34 = sbr.rel (0) target = $region21
    $region20: #{tpu_custom_call.1} parent=1 // pred_region
      %s36 = ssub.s32 1024, 1024
      %37 = vsyncadd [#allocation6], %s36
      %s38 = sshll.u32 [#allocation5], 4
      %s39 = int_to_ptr.vmem [resolvable:$true] %s38
      %44 = dma.hbm_to_vmem [thread:$0]  %s4, 1024, %s39, [#allocation6], 512, 512, 32
    $region21: #{tpu_custom_call.1} parent=1 // pred_fallthru
      _
    // Predicated region
    $region22: #{tpu_custom_call.1} parent=1 // pred_check
      _
    $region23: #{tpu_custom_call.1} parent=1 // pred_check_branch
      %46 = sbr.rel (0) target = $region25
    $region24: #{tpu_custom_call.1} parent=1 // pred_region
      _
    $region25: #{tpu_custom_call.1} parent=1 // pred_fallthru
      _
    // Predicated region
    $region26: #{tpu_custom_call.1} parent=1 // pred_check
      _
    $region27: #{tpu_custom_call.1} parent=1 // pred_check_branch
      %48 = sbr.rel (0) target = $region29
    $region28: #{tpu_custom_call.1} parent=1 // pred_region
      _
    $region29: #{tpu_custom_call.1} parent=1 // pred_fallthru
      _
    // Predicated region
    $region30: #{tpu_custom_call.1} parent=1 // pred_check
      _
    $region31: #{tpu_custom_call.1} parent=1 // pred_check_branch
      %50 = sbr.rel (0) target = $region33
    $region32: #{tpu_custom_call.1} parent=1 // pred_region
      %51 = dma.done [#allocation3], 1024
    $region33: #{tpu_custom_call.1} parent=1 // pred_fallthru
      _
    // Predicated region
    $region34: #{tpu_custom_call.1} parent=1 // pred_check
      _
    $region35: #{tpu_custom_call.1} parent=1 // pred_check_branch
      %53 = sbr.rel (0) target = $region37
    $region36: #{tpu_custom_call.1} parent=1 // pred_region
      %54 = dma.done [#allocation6], 1024
    $region37: #{tpu_custom_call.1} parent=1 // pred_fallthru
      _
    %v55 = vld [vmem:[%s0] sm:$0xff]
    %v56 = vld [vmem:[%s0 + $0x8] sm:$0xff]
    %v57 = vld [vmem:[#allocation2] sm:$0xff]
    %v58 = vld [vmem:[#allocation2 + $0x8] sm:$0xff]
    %v59 = vld [vmem:[#allocation2 + $0x10] sm:$0xff]
    %v60 = vld [vmem:[#allocation2 + $0x18] sm:$0xff]
    %v61 = vld [vmem:[#allocation2 + $0x20] sm:$0x3]
    %v62 = vld [vmem:[#allocation2 + $0x28] sm:$0x3]
    %v63 = vld [vmem:[#allocation2 + $0x30] sm:$0x3]
    %v64 = vld [vmem:[#allocation2 + $0x38] sm:$0x3]
    %v67 = vcombine.high %v55, %v55
    %v68 = vcombine.high %v56, %v56
    %71 = vrot.lane.b32.xlu0 %v55, 85
    %v72 = vpop.permute.xlu0 %71
    %73 = vrot.lane.b32.xlu0 %v67, 85
    %v74 = vpop.permute.xlu0 %73
    %75 = vrot.lane.b32.xlu0 %v56, 85
    %v76 = vpop.permute.xlu0 %75
    %77 = vrot.lane.b32.xlu0 %v68, 85
    %v78 = vpop.permute.xlu0 %77
    %v79 = vlaneseq
    %v80 = vand.u32 %v79, 127
    %vm81 = vcmp.lt.s32.totalorder %v80, 85
    %v82 = vsel %vm81, %v76, %v78
    %v83 = vsel %vm81, %v74, %v76
    %v84 = vsel %vm81, %v72, %v74
    %v85 = vsel %vm81, %v78, %v72
    %v86 = vlaneseq
    %v87 = vshrl.u32 %v86, 7
    %v88 = vsub.s32 0, %v87
    %v89 = vrot.slane %v57, %v88
    %v90 = vlaneseq
    %v91 = vshrl.u32 %v90, 7
    %v92 = vsub.s32 0, %v91
    %v93 = vrot.slane %v58, %v92
    %v94 = vlaneseq
    %v95 = vshrl.u32 %v94, 7
    %v96 = vsub.s32 0, %v95
    %v97 = vrot.slane %v59, %v96
    %v98 = vlaneseq
    %v99 = vshrl.u32 %v98, 7
    %v100 = vsub.s32 0, %v99
    %v101 = vrot.slane %v60, %v100
    %v102 = vmul.f32 %v85, %v89
    %v103 = vmul.f32 %v84, %v93
    %v104 = vmul.f32 %v83, %v97
    %v105 = vmul.f32 %v82, %v101
    %106 = vrot.lane.b32.xlu0 %v55, 80
    %v107 = vpop.permute.xlu0 %106
    %108 = vrot.lane.b32.xlu0 %v67, 80
    %v109 = vpop.permute.xlu0 %108
    %110 = vrot.lane.b32.xlu0 %v56, 80
    %v111 = vpop.permute.xlu0 %110
    %112 = vrot.lane.b32.xlu0 %v68, 80
    %v113 = vpop.permute.xlu0 %112
    %vm114 = vcmp.lt.s32.totalorder %v80, 80
    %v115 = vsel %vm114, %v111, %v113
    %v116 = vsel %vm114, %v109, %v111
    %v117 = vsel %vm114, %v107, %v109
    %v118 = vsel %vm114, %v113, %v107
    %v119 = vlaneseq
    %v120 = vshrl.u32 %v119, 7
    %v121 = vsub.s32 1, %v120
    %v122 = vrot.slane %v57, %v121
    %v123 = vlaneseq
    %v124 = vshrl.u32 %v123, 7
    %v125 = vsub.s32 1, %v124
    %v126 = vrot.slane %v58, %v125
    %v127 = vlaneseq
    %v128 = vshrl.u32 %v127, 7
    %v129 = vsub.s32 1, %v128
    %v130 = vrot.slane %v59, %v129
    %v131 = vlaneseq
    %v132 = vshrl.u32 %v131, 7
    %v133 = vsub.s32 1, %v132
    %v134 = vrot.slane %v60, %v133
    %v135 = vmul.f32 %v118, %v122
    %v136 = vmul.f32 %v117, %v126
    %v137 = vmul.f32 %v116, %v130
    %v138 = vmul.f32 %v115, %v134
    %139 = vrot.lane.b32.xlu0 %v55, 75
    %v140 = vpop.permute.xlu0 %139
    %141 = vrot.lane.b32.xlu0 %v67, 75
    %v142 = vpop.permute.xlu0 %141
    %143 = vrot.lane.b32.xlu0 %v56, 75
    %v144 = vpop.permute.xlu0 %143
    %145 = vrot.lane.b32.xlu0 %v68, 75
    %v146 = vpop.permute.xlu0 %145
    %vm147 = vcmp.lt.s32.totalorder %v80, 75
    %v148 = vsel %vm147, %v144, %v146
    %v149 = vsel %vm147, %v142, %v144
    %v150 = vsel %vm147, %v140, %v142
    %v151 = vsel %vm147, %v146, %v140
    %v152 = vlaneseq
    %v153 = vshrl.u32 %v152, 7
    %v154 = vsub.s32 2, %v153
    %v155 = vrot.slane %v57, %v154
    %v156 = vlaneseq
    %v157 = vshrl.u32 %v156, 7
    %v158 = vsub.s32 2, %v157
    %v159 = vrot.slane %v58, %v158
    %v160 = vlaneseq
    %v161 = vshrl.u32 %v160, 7
    %v162 = vsub.s32 2, %v161
    %v163 = vrot.slane %v59, %v162
    %v164 = vlaneseq
    %v165 = vshrl.u32 %v164, 7
    %v166 = vsub.s32 2, %v165
    %v167 = vrot.slane %v60, %v166
    %v168 = vmul.f32 %v151, %v155
    %v169 = vmul.f32 %v150, %v159
    %v170 = vmul.f32 %v149, %v163
    %v171 = vmul.f32 %v148, %v167
    %172 = vrot.lane.b32.xlu0 %v55, 5
    %v173 = vpop.permute.xlu0 %172
    %174 = vrot.lane.b32.xlu0 %v67, 5
    %v175 = vpop.permute.xlu0 %174
    %176 = vrot.lane.b32.xlu0 %v56, 5
    %v177 = vpop.permute.xlu0 %176
    %178 = vrot.lane.b32.xlu0 %v68, 5
    %v179 = vpop.permute.xlu0 %178
    %vm180 = vcmp.lt.s32.totalorder %v80, 5
    %v181 = vsel %vm180, %v177, %v179
    %v182 = vsel %vm180, %v175, %v177
    %v183 = vsel %vm180, %v173, %v175
    %v184 = vsel %vm180, %v179, %v173
    %v185 = vlaneseq
    %v186 = vshrl.u32 %v185, 7
    %v187 = vsub.s32 3, %v186
    %v188 = vrot.slane %v57, %v187
    %v189 = vlaneseq
    %v190 = vshrl.u32 %v189, 7
    %v191 = vsub.s32 3, %v190
    %v192 = vrot.slane %v58, %v191
    %v193 = vlaneseq
    %v194 = vshrl.u32 %v193, 7
    %v195 = vsub.s32 3, %v194
    %v196 = vrot.slane %v59, %v195
    %v197 = vlaneseq
    %v198 = vshrl.u32 %v197, 7
    %v199 = vsub.s32 3, %v198
    %v200 = vrot.slane %v60, %v199
    %v201 = vmul.f32 %v184, %v188
    %v202 = vmul.f32 %v183, %v192
    %v203 = vmul.f32 %v182, %v196
    %v204 = vmul.f32 %v181, %v200
    %v205 = vlaneseq
    %v206 = vshrl.u32 %v205, 7
    %v207 = vsub.s32 4, %v206
    %v208 = vrot.slane %v57, %v207
    %v209 = vlaneseq
    %v210 = vshrl.u32 %v209, 7
    %v211 = vsub.s32 4, %v210
    %v212 = vrot.slane %v58, %v211
    %v213 = vlaneseq
    %v214 = vshrl.u32 %v213, 7
    %v215 = vsub.s32 4, %v214
    %v216 = vrot.slane %v59, %v215
    %v217 = vlaneseq
    %v218 = vshrl.u32 %v217, 7
    %v219 = vsub.s32 4, %v218
    %v220 = vrot.slane %v60, %v219
    %v225 = vcombine.low %v208, %v212
    %v226 = vcombine.low %v216, %v220
    %v229 = vmul.f32 %v55, %v225
    %v230 = vmul.f32 %v56, %v226
    %231 = vrot.lane.b32.xlu0 %v55, 123
    %v232 = vpop.permute.xlu0 %231
    %233 = vrot.lane.b32.xlu0 %v67, 123
    %v234 = vpop.permute.xlu0 %233
    %235 = vrot.lane.b32.xlu0 %v56, 123
    %v236 = vpop.permute.xlu0 %235
    %237 = vrot.lane.b32.xlu0 %v68, 123
    %v238 = vpop.permute.xlu0 %237
    %vm239 = vcmp.lt.s32.totalorder %v80, 123
    %v240 = vsel %vm239, %v236, %v238
    %v241 = vsel %vm239, %v234, %v236
    %v242 = vsel %vm239, %v232, %v234
    %v243 = vsel %vm239, %v238, %v232
    %v244 = vlaneseq
    %v245 = vshrl.u32 %v244, 7
    %v246 = vsub.s32 5, %v245
    %v247 = vrot.slane %v57, %v246
    %v248 = vlaneseq
    %v249 = vshrl.u32 %v248, 7
    %v250 = vsub.s32 5, %v249
    %v251 = vrot.slane %v58, %v250
    %v252 = vlaneseq
    %v253 = vshrl.u32 %v252, 7
    %v254 = vsub.s32 5, %v253
    %v255 = vrot.slane %v59, %v254
    %v256 = vlaneseq
    %v257 = vshrl.u32 %v256, 7
    %v258 = vsub.s32 5, %v257
    %v259 = vrot.slane %v60, %v258
    %v260 = vmul.f32 %v242, %v247
    %v261 = vmul.f32 %v241, %v251
    %v262 = vmul.f32 %v240, %v255
    %v263 = vmul.f32 %v243, %v259
    %264 = vrot.lane.b32.xlu0 %v55, 53
    %v265 = vpop.permute.xlu0 %264
    %266 = vrot.lane.b32.xlu0 %v67, 53
    %v267 = vpop.permute.xlu0 %266
    %268 = vrot.lane.b32.xlu0 %v56, 53
    %v269 = vpop.permute.xlu0 %268
    %270 = vrot.lane.b32.xlu0 %v68, 53
    %v271 = vpop.permute.xlu0 %270
    %vm272 = vcmp.lt.s32.totalorder %v80, 53
    %v273 = vsel %vm272, %v269, %v271
    %v274 = vsel %vm272, %v267, %v269
    %v275 = vsel %vm272, %v265, %v267
    %v276 = vsel %vm272, %v271, %v265
    %v277 = vlaneseq
    %v278 = vshrl.u32 %v277, 7
    %v279 = vsub.s32 6, %v278
    %v280 = vrot.slane %v57, %v279
    %v281 = vlaneseq
    %v282 = vshrl.u32 %v281, 7
    %v283 = vsub.s32 6, %v282
    %v284 = vrot.slane %v58, %v283
    %v285 = vlaneseq
    %v286 = vshrl.u32 %v285, 7
    %v287 = vsub.s32 6, %v286
    %v288 = vrot.slane %v59, %v287
    %v289 = vlaneseq
    %v290 = vshrl.u32 %v289, 7
    %v291 = vsub.s32 6, %v290
    %v292 = vrot.slane %v60, %v291
    %v293 = vmul.f32 %v275, %v280
    %v294 = vmul.f32 %v274, %v284
    %v295 = vmul.f32 %v273, %v288
    %v296 = vmul.f32 %v276, %v292
    %297 = vrot.lane.b32.xlu0 %v55, 48
    %v298 = vpop.permute.xlu0 %297
    %299 = vrot.lane.b32.xlu0 %v67, 48
    %v300 = vpop.permute.xlu0 %299
    %301 = vrot.lane.b32.xlu0 %v56, 48
    %v302 = vpop.permute.xlu0 %301
    %303 = vrot.lane.b32.xlu0 %v68, 48
    %v304 = vpop.permute.xlu0 %303
    %vm305 = vcmp.lt.s32.totalorder %v80, 48
    %v306 = vsel %vm305, %v302, %v304
    %v307 = vsel %vm305, %v300, %v302
    %v308 = vsel %vm305, %v298, %v300
    %v309 = vsel %vm305, %v304, %v298
    %v310 = vlaneseq
    %v311 = vshrl.u32 %v310, 7
    %v312 = vsub.s32 7, %v311
    %v313 = vrot.slane %v57, %v312
    %v314 = vlaneseq
    %v315 = vshrl.u32 %v314, 7
    %v316 = vsub.s32 7, %v315
    %v317 = vrot.slane %v58, %v316
    %v318 = vlaneseq
    %v319 = vshrl.u32 %v318, 7
    %v320 = vsub.s32 7, %v319
    %v321 = vrot.slane %v59, %v320
    %v322 = vlaneseq
    %v323 = vshrl.u32 %v322, 7
    %v324 = vsub.s32 7, %v323
    %v325 = vrot.slane %v60, %v324
    %v326 = vmul.f32 %v308, %v313
    %v327 = vmul.f32 %v307, %v317
    %v328 = vmul.f32 %v306, %v321
    %v329 = vmul.f32 %v309, %v325
    %330 = vrot.lane.b32.xlu0 %v55, 43
    %v331 = vpop.permute.xlu0 %330
    %332 = vrot.lane.b32.xlu0 %v67, 43
    %v333 = vpop.permute.xlu0 %332
    %334 = vrot.lane.b32.xlu0 %v56, 43
    %v335 = vpop.permute.xlu0 %334
    %336 = vrot.lane.b32.xlu0 %v68, 43
    %v337 = vpop.permute.xlu0 %336
    %vm338 = vcmp.lt.s32.totalorder %v80, 43
    %v339 = vsel %vm338, %v335, %v337
    %v340 = vsel %vm338, %v333, %v335
    %v341 = vsel %vm338, %v331, %v333
    %v342 = vsel %vm338, %v337, %v331
    %v343 = vlaneseq
    %v344 = vshrl.u32 %v343, 7
    %v345 = vsub.s32 0, %v344
    %v346 = vrot.slane %v61, %v345
    %v347 = vlaneseq
    %v348 = vshrl.u32 %v347, 7
    %v349 = vsub.s32 0, %v348
    %v350 = vrot.slane %v62, %v349
    %v351 = vlaneseq
    %v352 = vshrl.u32 %v351, 7
    %v353 = vsub.s32 0, %v352
    %v354 = vrot.slane %v63, %v353
    %v355 = vlaneseq
    %v356 = vshrl.u32 %v355, 7
    %v357 = vsub.s32 0, %v356
    %v358 = vrot.slane %v64, %v357
    %v359 = vmul.f32 %v341, %v346
    %v360 = vmul.f32 %v340, %v350
    %v361 = vmul.f32 %v339, %v354
    %v362 = vmul.f32 %v342, %v358
    %v367 = vrot.slane %v135, 4
    %v368 = vrot.slane %v136, 4
    %v369 = vrot.slane %v137, 4
    %v370 = vrot.slane %v138, 4
    %v379 = vrot.slane %v201, 4
    %v380 = vrot.slane %v202, 4
    %v381 = vrot.slane %v203, 4
    %v382 = vrot.slane %v204, 4
    %v389 = vcombine.high %v229, %v229
    %v390 = vcombine.high %v230, %v230
    %v397 = vrot.slane %v260, 4
    %v398 = vrot.slane %v261, 4
    %v399 = vrot.slane %v262, 4
    %v400 = vrot.slane %v263, 4
    %v409 = vrot.slane %v326, 4
    %v410 = vrot.slane %v327, 4
    %v411 = vrot.slane %v328, 4
    %v412 = vrot.slane %v329, 4
    %v421 = vrot.slane %v61, 5
    %v422 = vrot.slane %v62, 5
    %v423 = vrot.slane %v63, 5
    %v424 = vrot.slane %v64, 5
    %vm429 = vcmask 1043456
    %v430 = vsel %vm429, %v102, %v367
    %v431 = vsel %vm429, %v103, %v368
    %v432 = vsel %vm429, %v104, %v369
    %v433 = vsel %vm429, %v105, %v370
    %v434 = vsel %vm429, %v168, %v379
    %v435 = vsel %vm429, %v169, %v380
    %v436 = vsel %vm429, %v170, %v381
    %v437 = vsel %vm429, %v171, %v382
    %v438 = vsel %vm429, %v229, %v397
    %v439 = vsel %vm429, %v389, %v398
    %v440 = vsel %vm429, %v230, %v399
    %v441 = vsel %vm429, %v390, %v400
    %v442 = vsel %vm429, %v293, %v409
    %v443 = vsel %vm429, %v294, %v410
    %v444 = vsel %vm429, %v295, %v411
    %v445 = vsel %vm429, %v296, %v412
    %v446 = vsel %vm429, %v359, %v421
    %v447 = vsel %vm429, %v360, %v422
    %v448 = vsel %vm429, %v361, %v423
    %v449 = vsel %vm429, %v362, %v424
    %v450 = vld [vmem:[%s1] sm:$0xf]
    %vm451 = vcmask 302080
    %v453 = vsel %vm451, %v450, 0
    %vm455 = vcmask 1044480
    %v457 = vsel %vm455, %v446, 0
    %v460 = vsel %vm455, %v447, 0
    %v463 = vsel %vm455, %v448, 0
    %v466 = vsel %vm455, %v449, 0
    %468 = vmatprep.subr.mxu0 %v431
    %469 = vmatpush1.msra.mxu0 %v430
    %470 = vmatprep.subr.mxu0 %v435
    %471 = vmatpush1.msra.mxu0 %v434
    %472 = vmatprep.subr.mxu0 %v439
    %473 = vmatpush1.msra.mxu0 %v438
    %474 = vmatprep.subr.mxu0 %v443
    %475 = vmatpush1.msra.mxu0 %v442
    %476 = vmatprep.subr.mxu0 %v460
    %477 = vmatpush1.msra.mxu0 %v457
    %478 = vmatprep.subr.mxu0 0.0
    %479 = vmatpush1.msra.mxu0 0.0
    %480 = vmatprep.subr.mxu0 0.0
    %481 = vmatpush1.msra.mxu0 0.0
    %482 = vmatprep.subr.mxu0 0.0
    %483 = vmatpush1.msra.mxu0 0.0
    %484 = vmatprep.subr.mxu0 0.0
    %485 = vmatpush1.msra.mxu0 0.0
    %486 = vmatprep.subr.mxu0 0.0
    %487 = vmatpush1.msra.mxu0 0.0
    %488 = vmatprep.subr.mxu0 0.0
    %489 = vmatpush1.msra.mxu0 0.0
    %490 = vmatprep.subr.mxu0 0.0
    %491 = vmatpush1.msra.mxu0 0.0
    %492 = vmatprep.subr.mxu0 0.0
    %493 = vmatpush1.msra.mxu0 0.0
    %494 = vmatprep.subr.mxu0 0.0
    %495 = vmatpush1.msra.mxu0 0.0
    %496 = vmatprep.subr.mxu0 0.0
    %497 = vmatpush1.msra.mxu0 0.0
    %498 = vmatprep.subr.mxu0 0.0
    %499 = vmatpush1.msra.mxu0 0.0
    %500 = vmatprep.subr.mxu0 0.0
    %501 = vmatpush1.msra.mxu0 0.0
    %502 = vmatprep.subr.mxu0 0.0
    %503 = vmatpush1.msra.mxu0 0.0
    %504 = vmatprep.subr.mxu0 0.0
    %505 = vmatpush1.msra.mxu0 0.0
    %506 = vmatprep.subr.mxu0 0.0
    %507 = vmatpush1.msra.mxu0 0.0
    %508 = vmatprep.subr.mxu0 0.0
    %509 = vmatpush1.msra.mxu0 0.0
    %510 = vmatprep.subr.mxu0 0.0
    %511 = vmatpush1.msra.mxu0 0.0
    %512 = vmatprep.subr.mxu0 0.0
    %513 = vmatpush1.msra.mxu0 0.0
    %514 = vmatprep.subr.mxu0 0.0
    %515 = vmatpush1.msra.mxu0 0.0
    %516 = vmatprep.subr.mxu0 0.0
    %517 = vmatpush1.msra.mxu0 0.0
    %518 = vmatprep.subr.mxu0 0.0
    %519 = vmatpush1.msra.mxu0 0.0
    %520 = vmatprep.subr.mxu0 0.0
    %521 = vmatpush1.msra.mxu0 0.0
    %522 = vmatprep.subr.mxu0 0.0
    %523 = vmatpush1.msra.mxu0 0.0
    %524 = vmatprep.subr.mxu0 0.0
    %525 = vmatpush1.msra.mxu0 0.0
    %526 = vmatprep.subr.mxu0 0.0
    %527 = vmatpush1.msra.mxu0 0.0
    %528 = vmatprep.subr.mxu0 0.0
    %529 = vmatpush1.msra.mxu0 0.0
    %530 = vmatprep.subr.mxu0 0.0
    %531 = vmatpush1.msra.mxu0 0.0
    %532 = vmatprep.mubr.f32.mxu0 0.0
    %533 = vmatmul.mubr.f32.gmra.mrb[0].mxu0 %v453
    %v534 = vpop.f32.mrb[0].mxu0
    %v535 = vadd.f32 0.0, %v534
    %v536 = vpop.f32.mrb[0].mxu0
    %v537 = vadd.f32 0.0, %v536
    %538 = vdwg.mxu0
    %539 = vmatprep.subr.mxu0 %v433
    %540 = vmatpush1.msra.mxu0 %v432
    %541 = vmatprep.subr.mxu0 %v437
    %542 = vmatpush1.msra.mxu0 %v436
    %543 = vmatprep.subr.mxu0 %v441
    %544 = vmatpush1.msra.mxu0 %v440
    %545 = vmatprep.subr.mxu0 %v445
    %546 = vmatpush1.msra.mxu0 %v444
    %547 = vmatprep.subr.mxu0 %v466
    %548 = vmatpush1.msra.mxu0 %v463
    %549 = vmatprep.subr.mxu0 0.0
    %550 = vmatpush1.msra.mxu0 0.0
    %551 = vmatprep.subr.mxu0 0.0
    %552 = vmatpush1.msra.mxu0 0.0
    %553 = vmatprep.subr.mxu0 0.0
    %554 = vmatpush1.msra.mxu0 0.0
    %555 = vmatprep.subr.mxu0 0.0
    %556 = vmatpush1.msra.mxu0 0.0
    %557 = vmatprep.subr.mxu0 0.0
    %558 = vmatpush1.msra.mxu0 0.0
    %559 = vmatprep.subr.mxu0 0.0
    %560 = vmatpush1.msra.mxu0 0.0
    %561 = vmatprep.subr.mxu0 0.0
    %562 = vmatpush1.msra.mxu0 0.0
    %563 = vmatprep.subr.mxu0 0.0
    %564 = vmatpush1.msra.mxu0 0.0
    %565 = vmatprep.subr.mxu0 0.0
    %566 = vmatpush1.msra.mxu0 0.0
    %567 = vmatprep.subr.mxu0 0.0
    %568 = vmatpush1.msra.mxu0 0.0
    %569 = vmatprep.subr.mxu0 0.0
    %570 = vmatpush1.msra.mxu0 0.0
    %571 = vmatprep.subr.mxu0 0.0
    %572 = vmatpush1.msra.mxu0 0.0
    %573 = vmatprep.subr.mxu0 0.0
    %574 = vmatpush1.msra.mxu0 0.0
    %575 = vmatprep.subr.mxu0 0.0
    %576 = vmatpush1.msra.mxu0 0.0
    %577 = vmatprep.subr.mxu0 0.0
    %578 = vmatpush1.msra.mxu0 0.0
    %579 = vmatprep.subr.mxu0 0.0
    %580 = vmatpush1.msra.mxu0 0.0
    %581 = vmatprep.subr.mxu0 0.0
    %582 = vmatpush1.msra.mxu0 0.0
    %583 = vmatprep.subr.mxu0 0.0
    %584 = vmatpush1.msra.mxu0 0.0
    %585 = vmatprep.subr.mxu0 0.0
    %586 = vmatpush1.msra.mxu0 0.0
    %587 = vmatprep.subr.mxu0 0.0
    %588 = vmatpush1.msra.mxu0 0.0
    %589 = vmatprep.subr.mxu0 0.0
    %590 = vmatpush1.msra.mxu0 0.0
    %591 = vmatprep.subr.mxu0 0.0
    %592 = vmatpush1.msra.mxu0 0.0
    %593 = vmatprep.subr.mxu0 0.0
    %594 = vmatpush1.msra.mxu0 0.0
    %595 = vmatprep.subr.mxu0 0.0
    %596 = vmatpush1.msra.mxu0 0.0
    %597 = vmatprep.subr.mxu0 0.0
    %598 = vmatpush1.msra.mxu0 0.0
    %599 = vmatprep.subr.mxu0 0.0
    %600 = vmatpush1.msra.mxu0 0.0
    %601 = vmatprep.subr.mxu0 0.0
    %602 = vmatpush1.msra.mxu0 0.0
    %603 = vmatprep.mubr.f32.mxu0 0.0
    %604 = vmatmul.mubr.f32.gmra.mrb[0].mxu0 %v453
    %v605 = vpop.f32.mrb[0].mxu0
    %v606 = vadd.f32 0.0, %v605
    %v607 = vpop.f32.mrb[0].mxu0
    %v608 = vadd.f32 0.0, %v607
    %609 = vdwg.mxu0
    %v610 = vmax.f32 %v535, 0.0
    %v611 = vmax.f32 %v537, 0.0
    %v612 = vmax.f32 %v606, 0.0
    %v613 = vmax.f32 %v608, 0.0
    %v614 = vld [vmem:[#allocation5] sm:$0xff]
    %v615 = vld [vmem:[#allocation5 + $0x8] sm:$0xff]
    %v616 = vld [vmem:[#allocation5 + $0x10] sm:$0xff]
    %v617 = vld [vmem:[#allocation5 + $0x18] sm:$0xff]
    %v618 = vld [vmem:[#allocation5 + $0x20] sm:$0x3]
    %v619 = vld [vmem:[#allocation5 + $0x28] sm:$0x3]
    %v620 = vld [vmem:[#allocation5 + $0x30] sm:$0x3]
    %v621 = vld [vmem:[#allocation5 + $0x38] sm:$0x3]
    %622 = vrot.lane.b32.xlu0 %v610, 17
    %v623 = vpop.permute.xlu0 %622
    %624 = vrot.lane.b32.xlu0 %v611, 17
    %v625 = vpop.permute.xlu0 %624
    %626 = vrot.lane.b32.xlu0 %v612, 17
    %v627 = vpop.permute.xlu0 %626
    %628 = vrot.lane.b32.xlu0 %v613, 17
    %v629 = vpop.permute.xlu0 %628
    %vm630 = vcmp.lt.s32.totalorder %v80, 17
    %v631 = vsel %vm630, %v627, %v629
    %v632 = vsel %vm630, %v625, %v627
    %v633 = vsel %vm630, %v623, %v625
    %v634 = vsel %vm630, %v629, %v623
    %v635 = vlaneseq
    %v636 = vshrl.u32 %v635, 7
    %v637 = vsub.s32 0, %v636
    %v638 = vrot.slane %v614, %v637
    %v639 = vlaneseq
    %v640 = vshrl.u32 %v639, 7
    %v641 = vsub.s32 0, %v640
    %v642 = vrot.slane %v615, %v641
    %v643 = vlaneseq
    %v644 = vshrl.u32 %v643, 7
    %v645 = vsub.s32 0, %v644
    %v646 = vrot.slane %v616, %v645
    %v647 = vlaneseq
    %v648 = vshrl.u32 %v647, 7
    %v649 = vsub.s32 0, %v648
    %v650 = vrot.slane %v617, %v649
    %v651 = vmul.f32 %v634, %v638
    %v652 = vmul.f32 %v633, %v642
    %v653 = vmul.f32 %v632, %v646
    %v654 = vmul.f32 %v631, %v650
    %655 = vrot.lane.b32.xlu0 %v610, 16
    %v656 = vpop.permute.xlu0 %655
    %657 = vrot.lane.b32.xlu0 %v611, 16
    %v658 = vpop.permute.xlu0 %657
    %659 = vrot.lane.b32.xlu0 %v612, 16
    %v660 = vpop.permute.xlu0 %659
    %661 = vrot.lane.b32.xlu0 %v613, 16
    %v662 = vpop.permute.xlu0 %661
    %vm663 = vcmp.lt.s32.totalorder %v80, 16
    %v664 = vsel %vm663, %v660, %v662
    %v665 = vsel %vm663, %v658, %v660
    %v666 = vsel %vm663, %v656, %v658
    %v667 = vsel %vm663, %v662, %v656
    %v668 = vlaneseq
    %v669 = vshrl.u32 %v668, 7
    %v670 = vsub.s32 1, %v669
    %v671 = vrot.slane %v614, %v670
    %v672 = vlaneseq
    %v673 = vshrl.u32 %v672, 7
    %v674 = vsub.s32 1, %v673
    %v675 = vrot.slane %v615, %v674
    %v676 = vlaneseq
    %v677 = vshrl.u32 %v676, 7
    %v678 = vsub.s32 1, %v677
    %v679 = vrot.slane %v616, %v678
    %v680 = vlaneseq
    %v681 = vshrl.u32 %v680, 7
    %v682 = vsub.s32 1, %v681
    %v683 = vrot.slane %v617, %v682
    %v684 = vmul.f32 %v667, %v671
    %v685 = vmul.f32 %v666, %v675
    %v686 = vmul.f32 %v665, %v679
    %v687 = vmul.f32 %v664, %v683
    %688 = vrot.lane.b32.xlu0 %v610, 15
    %v689 = vpop.permute.xlu0 %688
    %690 = vrot.lane.b32.xlu0 %v611, 15
    %v691 = vpop.permute.xlu0 %690
    %692 = vrot.lane.b32.xlu0 %v612, 15
    %v693 = vpop.permute.xlu0 %692
    %694 = vrot.lane.b32.xlu0 %v613, 15
    %v695 = vpop.permute.xlu0 %694
    %vm696 = vcmp.lt.s32.totalorder %v80, 15
    %v697 = vsel %vm696, %v693, %v695
    %v698 = vsel %vm696, %v691, %v693
    %v699 = vsel %vm696, %v689, %v691
    %v700 = vsel %vm696, %v695, %v689
    %v701 = vlaneseq
    %v702 = vshrl.u32 %v701, 7
    %v703 = vsub.s32 2, %v702
    %v704 = vrot.slane %v614, %v703
    %v705 = vlaneseq
    %v706 = vshrl.u32 %v705, 7
    %v707 = vsub.s32 2, %v706
    %v708 = vrot.slane %v615, %v707
    %v709 = vlaneseq
    %v710 = vshrl.u32 %v709, 7
    %v711 = vsub.s32 2, %v710
    %v712 = vrot.slane %v616, %v711
    %v713 = vlaneseq
    %v714 = vshrl.u32 %v713, 7
    %v715 = vsub.s32 2, %v714
    %v716 = vrot.slane %v617, %v715
    %v717 = vmul.f32 %v700, %v704
    %v718 = vmul.f32 %v699, %v708
    %v719 = vmul.f32 %v698, %v712
    %v720 = vmul.f32 %v697, %v716
    %721 = vrot.lane.b32.xlu0 %v610, 1
    %v722 = vpop.permute.xlu0 %721
    %723 = vrot.lane.b32.xlu0 %v611, 1
    %v724 = vpop.permute.xlu0 %723
    %725 = vrot.lane.b32.xlu0 %v612, 1
    %v726 = vpop.permute.xlu0 %725
    %727 = vrot.lane.b32.xlu0 %v613, 1
    %v728 = vpop.permute.xlu0 %727
    %vm729 = vcmp.lt.s32.totalorder %v80, 1
    %v730 = vsel %vm729, %v726, %v728
    %v731 = vsel %vm729, %v724, %v726
    %v732 = vsel %vm729, %v722, %v724
    %v733 = vsel %vm729, %v728, %v722
    %v734 = vlaneseq
    %v735 = vshrl.u32 %v734, 7
    %v736 = vsub.s32 3, %v735
    %v737 = vrot.slane %v614, %v736
    %v738 = vlaneseq
    %v739 = vshrl.u32 %v738, 7
    %v740 = vsub.s32 3, %v739
    %v741 = vrot.slane %v615, %v740
    %v742 = vlaneseq
    %v743 = vshrl.u32 %v742, 7
    %v744 = vsub.s32 3, %v743
    %v745 = vrot.slane %v616, %v744
    %v746 = vlaneseq
    %v747 = vshrl.u32 %v746, 7
    %v748 = vsub.s32 3, %v747
    %v749 = vrot.slane %v617, %v748
    %v750 = vmul.f32 %v733, %v737
    %v751 = vmul.f32 %v732, %v741
    %v752 = vmul.f32 %v731, %v745
    %v753 = vmul.f32 %v730, %v749
    %v754 = vlaneseq
    %v755 = vshrl.u32 %v754, 7
    %v756 = vsub.s32 4, %v755
    %v757 = vrot.slane %v614, %v756
    %v758 = vlaneseq
    %v759 = vshrl.u32 %v758, 7
    %v760 = vsub.s32 4, %v759
    %v761 = vrot.slane %v615, %v760
    %v762 = vlaneseq
    %v763 = vshrl.u32 %v762, 7
    %v764 = vsub.s32 4, %v763
    %v765 = vrot.slane %v616, %v764
    %v766 = vlaneseq
    %v767 = vshrl.u32 %v766, 7
    %v768 = vsub.s32 4, %v767
    %v769 = vrot.slane %v617, %v768
    %v770 = vmul.f32 %v610, %v757
    %v771 = vmul.f32 %v611, %v761
    %v772 = vmul.f32 %v612, %v765
    %v773 = vmul.f32 %v613, %v769
    %774 = vrot.lane.b32.xlu0 %v610, 127
    %v775 = vpop.permute.xlu0 %774
    %776 = vrot.lane.b32.xlu0 %v611, 127
    %v777 = vpop.permute.xlu0 %776
    %778 = vrot.lane.b32.xlu0 %v612, 127
    %v779 = vpop.permute.xlu0 %778
    %780 = vrot.lane.b32.xlu0 %v613, 127
    %v781 = vpop.permute.xlu0 %780
    %vm782 = vcmp.lt.s32.totalorder %v80, 127
    %v783 = vsel %vm782, %v779, %v781
    %v784 = vsel %vm782, %v777, %v779
    %v785 = vsel %vm782, %v775, %v777
    %v786 = vsel %vm782, %v781, %v775
    %v787 = vlaneseq
    %v788 = vshrl.u32 %v787, 7
    %v789 = vsub.s32 5, %v788
    %v790 = vrot.slane %v614, %v789
    %v791 = vlaneseq
    %v792 = vshrl.u32 %v791, 7
    %v793 = vsub.s32 5, %v792
    %v794 = vrot.slane %v615, %v793
    %v795 = vlaneseq
    %v796 = vshrl.u32 %v795, 7
    %v797 = vsub.s32 5, %v796
    %v798 = vrot.slane %v616, %v797
    %v799 = vlaneseq
    %v800 = vshrl.u32 %v799, 7
    %v801 = vsub.s32 5, %v800
    %v802 = vrot.slane %v617, %v801
    %v803 = vmul.f32 %v785, %v790
    %v804 = vmul.f32 %v784, %v794
    %v805 = vmul.f32 %v783, %v798
    %v806 = vmul.f32 %v786, %v802
    %807 = vrot.lane.b32.xlu0 %v610, 113
    %v808 = vpop.permute.xlu0 %807
    %809 = vrot.lane.b32.xlu0 %v611, 113
    %v810 = vpop.permute.xlu0 %809
    %811 = vrot.lane.b32.xlu0 %v612, 113
    %v812 = vpop.permute.xlu0 %811
    %813 = vrot.lane.b32.xlu0 %v613, 113
    %v814 = vpop.permute.xlu0 %813
    %vm815 = vcmp.lt.s32.totalorder %v80, 113
    %v816 = vsel %vm815, %v812, %v814
    %v817 = vsel %vm815, %v810, %v812
    %v818 = vsel %vm815, %v808, %v810
    %v819 = vsel %vm815, %v814, %v808
    %v820 = vlaneseq
    %v821 = vshrl.u32 %v820, 7
    %v822 = vsub.s32 6, %v821
    %v823 = vrot.slane %v614, %v822
    %v824 = vlaneseq
    %v825 = vshrl.u32 %v824, 7
    %v826 = vsub.s32 6, %v825
    %v827 = vrot.slane %v615, %v826
    %v828 = vlaneseq
    %v829 = vshrl.u32 %v828, 7
    %v830 = vsub.s32 6, %v829
    %v831 = vrot.slane %v616, %v830
    %v832 = vlaneseq
    %v833 = vshrl.u32 %v832, 7
    %v834 = vsub.s32 6, %v833
    %v835 = vrot.slane %v617, %v834
    %v836 = vmul.f32 %v818, %v823
    %v837 = vmul.f32 %v817, %v827
    %v838 = vmul.f32 %v816, %v831
    %v839 = vmul.f32 %v819, %v835
    %840 = vrot.lane.b32.xlu0 %v610, 112
    %v841 = vpop.permute.xlu0 %840
    %842 = vrot.lane.b32.xlu0 %v611, 112
    %v843 = vpop.permute.xlu0 %842
    %844 = vrot.lane.b32.xlu0 %v612, 112
    %v845 = vpop.permute.xlu0 %844
    %846 = vrot.lane.b32.xlu0 %v613, 112
    %v847 = vpop.permute.xlu0 %846
    %vm848 = vcmp.lt.s32.totalorder %v80, 112
    %v849 = vsel %vm848, %v845, %v847
    %v850 = vsel %vm848, %v843, %v845
    %v851 = vsel %vm848, %v841, %v843
    %v852 = vsel %vm848, %v847, %v841
    %v853 = vlaneseq
    %v854 = vshrl.u32 %v853, 7
    %v855 = vsub.s32 7, %v854
    %v856 = vrot.slane %v614, %v855
    %v857 = vlaneseq
    %v858 = vshrl.u32 %v857, 7
    %v859 = vsub.s32 7, %v858
    %v860 = vrot.slane %v615, %v859
    %v861 = vlaneseq
    %v862 = vshrl.u32 %v861, 7
    %v863 = vsub.s32 7, %v862
    %v864 = vrot.slane %v616, %v863
    %v865 = vlaneseq
    %v866 = vshrl.u32 %v865, 7
    %v867 = vsub.s32 7, %v866
    %v868 = vrot.slane %v617, %v867
    %v869 = vmul.f32 %v851, %v856
    %v870 = vmul.f32 %v850, %v860
    %v871 = vmul.f32 %v849, %v864
    %v872 = vmul.f32 %v852, %v868
    %873 = vrot.lane.b32.xlu0 %v610, 111
    %v874 = vpop.permute.xlu0 %873
    %875 = vrot.lane.b32.xlu0 %v611, 111
    %v876 = vpop.permute.xlu0 %875
    %877 = vrot.lane.b32.xlu0 %v612, 111
    %v878 = vpop.permute.xlu0 %877
    %879 = vrot.lane.b32.xlu0 %v613, 111
    %v880 = vpop.permute.xlu0 %879
    %vm881 = vcmp.lt.s32.totalorder %v80, 111
    %v882 = vsel %vm881, %v878, %v880
    %v883 = vsel %vm881, %v876, %v878
    %v884 = vsel %vm881, %v874, %v876
    %v885 = vsel %vm881, %v880, %v874
    %v886 = vlaneseq
    %v887 = vshrl.u32 %v886, 7
    %v888 = vsub.s32 0, %v887
    %v889 = vrot.slane %v618, %v888
    %v890 = vlaneseq
    %v891 = vshrl.u32 %v890, 7
    %v892 = vsub.s32 0, %v891
    %v893 = vrot.slane %v619, %v892
    %v894 = vlaneseq
    %v895 = vshrl.u32 %v894, 7
    %v896 = vsub.s32 0, %v895
    %v897 = vrot.slane %v620, %v896
    %v898 = vlaneseq
    %v899 = vshrl.u32 %v898, 7
    %v900 = vsub.s32 0, %v899
    %v901 = vrot.slane %v621, %v900
    %v902 = vmul.f32 %v884, %v889
    %v903 = vmul.f32 %v883, %v893
    %v904 = vmul.f32 %v882, %v897
    %v905 = vmul.f32 %v885, %v901
    %v910 = vrot.slane %v684, 4
    %v911 = vrot.slane %v685, 4
    %v912 = vrot.slane %v686, 4
    %v913 = vrot.slane %v687, 4
    %v922 = vrot.slane %v750, 4
    %v923 = vrot.slane %v751, 4
    %v924 = vrot.slane %v752, 4
    %v925 = vrot.slane %v753, 4
    %v934 = vrot.slane %v803, 4
    %v935 = vrot.slane %v804, 4
    %v936 = vrot.slane %v805, 4
    %v937 = vrot.slane %v806, 4
    %v946 = vrot.slane %v869, 4
    %v947 = vrot.slane %v870, 4
    %v948 = vrot.slane %v871, 4
    %v949 = vrot.slane %v872, 4
    %v958 = vrot.slane %v618, 5
    %v959 = vrot.slane %v619, 5
    %v960 = vrot.slane %v620, 5
    %v961 = vrot.slane %v621, 5
    %v966 = vsel %vm429, %v651, %v910
    %v967 = vsel %vm429, %v652, %v911
    %v968 = vsel %vm429, %v653, %v912
    %v969 = vsel %vm429, %v654, %v913
    %v970 = vsel %vm429, %v717, %v922
    %v971 = vsel %vm429, %v718, %v923
    %v972 = vsel %vm429, %v719, %v924
    %v973 = vsel %vm429, %v720, %v925
    %v974 = vsel %vm429, %v770, %v934
    %v975 = vsel %vm429, %v771, %v935
    %v976 = vsel %vm429, %v772, %v936
    %v977 = vsel %vm429, %v773, %v937
    %v978 = vsel %vm429, %v836, %v946
    %v979 = vsel %vm429, %v837, %v947
    %v980 = vsel %vm429, %v838, %v948
    %v981 = vsel %vm429, %v839, %v949
    %v982 = vsel %vm429, %v902, %v958
    %v983 = vsel %vm429, %v903, %v959
    %v984 = vsel %vm429, %v904, %v960
    %v985 = vsel %vm429, %v905, %v961
    %v986 = vld [vmem:[%s3] sm:$0xf]
    %v988 = vsel %vm451, %v986, 0
    %v991 = vsel %vm455, %v982, 0
    %v994 = vsel %vm455, %v983, 0
    %v997 = vsel %vm455, %v984, 0
    %v1000 = vsel %vm455, %v985, 0
    %1002 = vmatprep.subr.mxu0 %v967
    %1003 = vmatpush1.msra.mxu0 %v966
    %1004 = vmatprep.subr.mxu0 %v971
    %1005 = vmatpush1.msra.mxu0 %v970
    %1006 = vmatprep.subr.mxu0 %v975
    %1007 = vmatpush1.msra.mxu0 %v974
    %1008 = vmatprep.subr.mxu0 %v979
    %1009 = vmatpush1.msra.mxu0 %v978
    %1010 = vmatprep.subr.mxu0 %v994
    %1011 = vmatpush1.msra.mxu0 %v991
    %1012 = vmatprep.subr.mxu0 0.0
    %1013 = vmatpush1.msra.mxu0 0.0
    %1014 = vmatprep.subr.mxu0 0.0
    %1015 = vmatpush1.msra.mxu0 0.0
    %1016 = vmatprep.subr.mxu0 0.0
    %1017 = vmatpush1.msra.mxu0 0.0
    %1018 = vmatprep.subr.mxu0 0.0
    %1019 = vmatpush1.msra.mxu0 0.0
    %1020 = vmatprep.subr.mxu0 0.0
    %1021 = vmatpush1.msra.mxu0 0.0
    %1022 = vmatprep.subr.mxu0 0.0
    %1023 = vmatpush1.msra.mxu0 0.0
    %1024 = vmatprep.subr.mxu0 0.0
    %1025 = vmatpush1.msra.mxu0 0.0
    %1026 = vmatprep.subr.mxu0 0.0
    %1027 = vmatpush1.msra.mxu0 0.0
    %1028 = vmatprep.subr.mxu0 0.0
    %1029 = vmatpush1.msra.mxu0 0.0
    %1030 = vmatprep.subr.mxu0 0.0
    %1031 = vmatpush1.msra.mxu0 0.0
    %1032 = vmatprep.subr.mxu0 0.0
    %1033 = vmatpush1.msra.mxu0 0.0
    %1034 = vmatprep.subr.mxu0 0.0
    %1035 = vmatpush1.msra.mxu0 0.0
    %1036 = vmatprep.subr.mxu0 0.0
    %1037 = vmatpush1.msra.mxu0 0.0
    %1038 = vmatprep.subr.mxu0 0.0
    %1039 = vmatpush1.msra.mxu0 0.0
    %1040 = vmatprep.subr.mxu0 0.0
    %1041 = vmatpush1.msra.mxu0 0.0
    %1042 = vmatprep.subr.mxu0 0.0
    %1043 = vmatpush1.msra.mxu0 0.0
    %1044 = vmatprep.subr.mxu0 0.0
    %1045 = vmatpush1.msra.mxu0 0.0
    %1046 = vmatprep.subr.mxu0 0.0
    %1047 = vmatpush1.msra.mxu0 0.0
    %1048 = vmatprep.subr.mxu0 0.0
    %1049 = vmatpush1.msra.mxu0 0.0
    %1050 = vmatprep.subr.mxu0 0.0
    %1051 = vmatpush1.msra.mxu0 0.0
    %1052 = vmatprep.subr.mxu0 0.0
    %1053 = vmatpush1.msra.mxu0 0.0
    %1054 = vmatprep.subr.mxu0 0.0
    %1055 = vmatpush1.msra.mxu0 0.0
    %1056 = vmatprep.subr.mxu0 0.0
    %1057 = vmatpush1.msra.mxu0 0.0
    %1058 = vmatprep.subr.mxu0 0.0
    %1059 = vmatpush1.msra.mxu0 0.0
    %1060 = vmatprep.subr.mxu0 0.0
    %1061 = vmatpush1.msra.mxu0 0.0
    %1062 = vmatprep.subr.mxu0 0.0
    %1063 = vmatpush1.msra.mxu0 0.0
    %1064 = vmatprep.subr.mxu0 0.0
    %1065 = vmatpush1.msra.mxu0 0.0
    %1066 = vmatprep.mubr.f32.mxu0 0.0
    %1067 = vmatmul.mubr.f32.gmra.mrb[0].mxu0 %v988
    %v1068 = vpop.f32.mrb[0].mxu0
    %v1069 = vadd.f32 0.0, %v1068
    %v1070 = vpop.f32.mrb[0].mxu0
    %v1071 = vadd.f32 0.0, %v1070
    %1072 = vdwg.mxu0
    %1073 = vmatprep.subr.mxu0 %v969
    %1074 = vmatpush1.msra.mxu0 %v968
    %1075 = vmatprep.subr.mxu0 %v973
    %1076 = vmatpush1.msra.mxu0 %v972
    %1077 = vmatprep.subr.mxu0 %v977
    %1078 = vmatpush1.msra.mxu0 %v976
    %1079 = vmatprep.subr.mxu0 %v981
    %1080 = vmatpush1.msra.mxu0 %v980
    %1081 = vmatprep.subr.mxu0 %v1000
    %1082 = vmatpush1.msra.mxu0 %v997
    %1083 = vmatprep.subr.mxu0 0.0
    %1084 = vmatpush1.msra.mxu0 0.0
    %1085 = vmatprep.subr.mxu0 0.0
    %1086 = vmatpush1.msra.mxu0 0.0
    %1087 = vmatprep.subr.mxu0 0.0
    %1088 = vmatpush1.msra.mxu0 0.0
    %1089 = vmatprep.subr.mxu0 0.0
    %1090 = vmatpush1.msra.mxu0 0.0
    %1091 = vmatprep.subr.mxu0 0.0
    %1092 = vmatpush1.msra.mxu0 0.0
    %1093 = vmatprep.subr.mxu0 0.0
    %1094 = vmatpush1.msra.mxu0 0.0
    %1095 = vmatprep.subr.mxu0 0.0
    %1096 = vmatpush1.msra.mxu0 0.0
    %1097 = vmatprep.subr.mxu0 0.0
    %1098 = vmatpush1.msra.mxu0 0.0
    %1099 = vmatprep.subr.mxu0 0.0
    %1100 = vmatpush1.msra.mxu0 0.0
    %1101 = vmatprep.subr.mxu0 0.0
    %1102 = vmatpush1.msra.mxu0 0.0
    %1103 = vmatprep.subr.mxu0 0.0
    %1104 = vmatpush1.msra.mxu0 0.0
    %1105 = vmatprep.subr.mxu0 0.0
    %1106 = vmatpush1.msra.mxu0 0.0
    %1107 = vmatprep.subr.mxu0 0.0
    %1108 = vmatpush1.msra.mxu0 0.0
    %1109 = vmatprep.subr.mxu0 0.0
    %1110 = vmatpush1.msra.mxu0 0.0
    %1111 = vmatprep.subr.mxu0 0.0
    %1112 = vmatpush1.msra.mxu0 0.0
    %1113 = vmatprep.subr.mxu0 0.0
    %1114 = vmatpush1.msra.mxu0 0.0
    %1115 = vmatprep.subr.mxu0 0.0
    %1116 = vmatpush1.msra.mxu0 0.0
    %1117 = vmatprep.subr.mxu0 0.0
    %1118 = vmatpush1.msra.mxu0 0.0
    %1119 = vmatprep.subr.mxu0 0.0
    %1120 = vmatpush1.msra.mxu0 0.0
    %1121 = vmatprep.subr.mxu0 0.0
    %1122 = vmatpush1.msra.mxu0 0.0
    %1123 = vmatprep.subr.mxu0 0.0
    %1124 = vmatpush1.msra.mxu0 0.0
    %1125 = vmatprep.subr.mxu0 0.0
    %1126 = vmatpush1.msra.mxu0 0.0
    %1127 = vmatprep.subr.mxu0 0.0
    %1128 = vmatpush1.msra.mxu0 0.0
    %1129 = vmatprep.subr.mxu0 0.0
    %1130 = vmatpush1.msra.mxu0 0.0
    %1131 = vmatprep.subr.mxu0 0.0
    %1132 = vmatpush1.msra.mxu0 0.0
    %1133 = vmatprep.subr.mxu0 0.0
    %1134 = vmatpush1.msra.mxu0 0.0
    %1135 = vmatprep.subr.mxu0 0.0
    %1136 = vmatpush1.msra.mxu0 0.0
    %1137 = vmatprep.mubr.f32.mxu0 0.0
    %1138 = vmatmul.mubr.f32.gmra.mrb[0].mxu0 %v988
    %v1139 = vpop.f32.mrb[0].mxu0
    %v1140 = vadd.f32 0.0, %v1139
    %v1141 = vpop.f32.mrb[0].mxu0
    %v1142 = vadd.f32 0.0, %v1141
    %1143 = vdwg.mxu0
    %v1144 = vmax.f32 %v1069, 0.0
    %v1145 = vmax.f32 %v1071, 0.0
    %v1146 = vmax.f32 %v1140, 0.0
    %v1147 = vmax.f32 %v1142, 0.0
    %v1148 = vld [vmem:[%s5] sm:$0xff]
    %v1149 = vld [vmem:[%s6] sm:$0xff]
    %1151 = vset.pattern.permute.xlu0 0
    %1152 = vperm.xlu0 %1151, %v1149
    %v1153 = vpop.permute.xlu0 %1152
    %vm1155 = vcmask 31744
    %v1157 = vsel %vm1155, %v1148, 0
    %v1160 = vsel %vm429, %v1144, 0
    %v1163 = vsel %vm429, %v1145, 0
    %v1166 = vsel %vm429, %v1146, 0
    %v1169 = vsel %vm429, %v1147, 0
    %1171 = vmatprep.subr.mxu0 %v1163
    %1172 = vmatpush1.msra.mxu0 %v1160
    %1173 = vmatprep.subr.mxu0 0.0
    %1174 = vmatpush1.msra.mxu0 0.0
    %1175 = vmatprep.subr.mxu0 0.0
    %1176 = vmatpush1.msra.mxu0 0.0
    %1177 = vmatprep.subr.mxu0 0.0
    %1178 = vmatpush1.msra.mxu0 0.0
    %1179 = vmatprep.subr.mxu0 0.0
    %1180 = vmatpush1.msra.mxu0 0.0
    %1181 = vmatprep.subr.mxu0 0.0
    %1182 = vmatpush1.msra.mxu0 0.0
    %1183 = vmatprep.subr.mxu0 0.0
    %1184 = vmatpush1.msra.mxu0 0.0
    %1185 = vmatprep.subr.mxu0 0.0
    %1186 = vmatpush1.msra.mxu0 0.0
    %1187 = vmatprep.subr.mxu0 0.0
    %1188 = vmatpush1.msra.mxu0 0.0
    %1189 = vmatprep.subr.mxu0 0.0
    %1190 = vmatpush1.msra.mxu0 0.0
    %1191 = vmatprep.subr.mxu0 0.0
    %1192 = vmatpush1.msra.mxu0 0.0
    %1193 = vmatprep.subr.mxu0 0.0
    %1194 = vmatpush1.msra.mxu0 0.0
    %1195 = vmatprep.subr.mxu0 0.0
    %1196 = vmatpush1.msra.mxu0 0.0
    %1197 = vmatprep.subr.mxu0 0.0
    %1198 = vmatpush1.msra.mxu0 0.0
    %1199 = vmatprep.subr.mxu0 0.0
    %1200 = vmatpush1.msra.mxu0 0.0
    %1201 = vmatprep.subr.mxu0 0.0
    %1202 = vmatpush1.msra.mxu0 0.0
    %1203 = vmatprep.subr.mxu0 0.0
    %1204 = vmatpush1.msra.mxu0 0.0
    %1205 = vmatprep.subr.mxu0 0.0
    %1206 = vmatpush1.msra.mxu0 0.0
    %1207 = vmatprep.subr.mxu0 0.0
    %1208 = vmatpush1.msra.mxu0 0.0
    %1209 = vmatprep.subr.mxu0 0.0
    %1210 = vmatpush1.msra.mxu0 0.0
    %1211 = vmatprep.subr.mxu0 0.0
    %1212 = vmatpush1.msra.mxu0 0.0
    %1213 = vmatprep.subr.mxu0 0.0
    %1214 = vmatpush1.msra.mxu0 0.0
    %1215 = vmatprep.subr.mxu0 0.0
    %1216 = vmatpush1.msra.mxu0 0.0
    %1217 = vmatprep.subr.mxu0 0.0
    %1218 = vmatpush1.msra.mxu0 0.0
    %1219 = vmatprep.subr.mxu0 0.0
    %1220 = vmatpush1.msra.mxu0 0.0
    %1221 = vmatprep.subr.mxu0 0.0
    %1222 = vmatpush1.msra.mxu0 0.0
    %1223 = vmatprep.subr.mxu0 0.0
    %1224 = vmatpush1.msra.mxu0 0.0
    %1225 = vmatprep.subr.mxu0 0.0
    %1226 = vmatpush1.msra.mxu0 0.0
    %1227 = vmatprep.subr.mxu0 0.0
    %1228 = vmatpush1.msra.mxu0 0.0
    %1229 = vmatprep.subr.mxu0 0.0
    %1230 = vmatpush1.msra.mxu0 0.0
    %1231 = vmatprep.subr.mxu0 0.0
    %1232 = vmatpush1.msra.mxu0 0.0
    %1233 = vmatprep.subr.mxu0 0.0
    %1234 = vmatpush1.msra.mxu0 0.0
    %1235 = vmatprep.mubr.f32.mxu0 0.0
    %1236 = vmatmul.mubr.f32.gmra.mrb[0].mxu0 %v1157
    %v1237 = vpop.f32.mrb[0].mxu0
    %v1238 = vadd.f32 %v1153, %v1237
    %v1239 = vpop.f32.mrb[0].mxu0
    %v1240 = vadd.f32 %v1153, %v1239
    %1241 = vdwg.mxu0
    %1242 = vmatprep.subr.mxu0 %v1169
    %1243 = vmatpush1.msra.mxu0 %v1166
    %1244 = vmatprep.subr.mxu0 0.0
    %1245 = vmatpush1.msra.mxu0 0.0
    %1246 = vmatprep.subr.mxu0 0.0
    %1247 = vmatpush1.msra.mxu0 0.0
    %1248 = vmatprep.subr.mxu0 0.0
    %1249 = vmatpush1.msra.mxu0 0.0
    %1250 = vmatprep.subr.mxu0 0.0
    %1251 = vmatpush1.msra.mxu0 0.0
    %1252 = vmatprep.subr.mxu0 0.0
    %1253 = vmatpush1.msra.mxu0 0.0
    %1254 = vmatprep.subr.mxu0 0.0
    %1255 = vmatpush1.msra.mxu0 0.0
    %1256 = vmatprep.subr.mxu0 0.0
    %1257 = vmatpush1.msra.mxu0 0.0
    %1258 = vmatprep.subr.mxu0 0.0
    %1259 = vmatpush1.msra.mxu0 0.0
    %1260 = vmatprep.subr.mxu0 0.0
    %1261 = vmatpush1.msra.mxu0 0.0
    %1262 = vmatprep.subr.mxu0 0.0
    %1263 = vmatpush1.msra.mxu0 0.0
    %1264 = vmatprep.subr.mxu0 0.0
    %1265 = vmatpush1.msra.mxu0 0.0
    %1266 = vmatprep.subr.mxu0 0.0
    %1267 = vmatpush1.msra.mxu0 0.0
    %1268 = vmatprep.subr.mxu0 0.0
    %1269 = vmatpush1.msra.mxu0 0.0
    %1270 = vmatprep.subr.mxu0 0.0
    %1271 = vmatpush1.msra.mxu0 0.0
    %1272 = vmatprep.subr.mxu0 0.0
    %1273 = vmatpush1.msra.mxu0 0.0
    %1274 = vmatprep.subr.mxu0 0.0
    %1275 = vmatpush1.msra.mxu0 0.0
    %1276 = vmatprep.subr.mxu0 0.0
    %1277 = vmatpush1.msra.mxu0 0.0
    %1278 = vmatprep.subr.mxu0 0.0
    %1279 = vmatpush1.msra.mxu0 0.0
    %1280 = vmatprep.subr.mxu0 0.0
    %1281 = vmatpush1.msra.mxu0 0.0
    %1282 = vmatprep.subr.mxu0 0.0
    %1283 = vmatpush1.msra.mxu0 0.0
    %1284 = vmatprep.subr.mxu0 0.0
    %1285 = vmatpush1.msra.mxu0 0.0
    %1286 = vmatprep.subr.mxu0 0.0
    %1287 = vmatpush1.msra.mxu0 0.0
    %1288 = vmatprep.subr.mxu0 0.0
    %1289 = vmatpush1.msra.mxu0 0.0
    %1290 = vmatprep.subr.mxu0 0.0
    %1291 = vmatpush1.msra.mxu0 0.0
    %1292 = vmatprep.subr.mxu0 0.0
    %1293 = vmatpush1.msra.mxu0 0.0
    %1294 = vmatprep.subr.mxu0 0.0
    %1295 = vmatpush1.msra.mxu0 0.0
    %1296 = vmatprep.subr.mxu0 0.0
    %1297 = vmatpush1.msra.mxu0 0.0
    %1298 = vmatprep.subr.mxu0 0.0
    %1299 = vmatpush1.msra.mxu0 0.0
    %1300 = vmatprep.subr.mxu0 0.0
    %1301 = vmatpush1.msra.mxu0 0.0
    %1302 = vmatprep.subr.mxu0 0.0
    %1303 = vmatpush1.msra.mxu0 0.0
    %1304 = vmatprep.subr.mxu0 0.0
    %1305 = vmatpush1.msra.mxu0 0.0
    %1306 = vmatprep.mubr.f32.mxu0 0.0
    %1307 = vmatmul.mubr.f32.gmra.mrb[0].mxu0 %v1157
    %v1308 = vpop.f32.mrb[0].mxu0
    %v1309 = vadd.f32 %v1153, %v1308
    %v1310 = vpop.f32.mrb[0].mxu0
    %v1311 = vadd.f32 %v1153, %v1310
    %1312 = vdwg.mxu0
    %1313 = vst [vmem:[#allocation7] sm:$0xff] %v1238
    %1314 = vst [vmem:[#allocation7 + $0x8] sm:$0xff] %v1240
    %1315 = vst [vmem:[#allocation7 + $0x10] sm:$0xff] %v1309
    %1316 = vst [vmem:[#allocation7 + $0x18] sm:$0xff] %v1311
    // Predicated region
    $region38: #{tpu_custom_call.1} parent=1 // pred_check
      _
    $region39: #{tpu_custom_call.1} parent=1 // pred_check_branch
      %1318 = sbr.rel (0) target = $region41
    $region40: #{tpu_custom_call.1} parent=1 // pred_region
      %s1320 = ssub.s32 512, 512
      %1321 = vsyncadd [#allocation4], %s1320
      %s1323 = sshll.u32 [#allocation7], 4
      %s1324 = int_to_ptr.vmem [resolvable:$true] %s1323
      %1326 = dma.vmem_to_hbm [thread:$0]  %s1324, 512, %s7, [#allocation4]
    $region41: #{tpu_custom_call.1} parent=1 // pred_fallthru
      _
    // Predicated region
    $region42: #{tpu_custom_call.1} parent=1 // pred_check
      _
    $region43: #{tpu_custom_call.1} parent=1 // pred_check_branch
      %1328 = sbr.rel (0) target = $region45
    $region44: #{tpu_custom_call.1} parent=1 // pred_region
      %1329 = dma.done [#allocation4], 512
    $region45: #{tpu_custom_call.1} parent=1 // pred_fallthru
      _
    %1330 = vsyncpa [#allocation3], 1
    %1331 = vsyncpa [#allocation6], 1
    %1332 = vsyncpa [#allocation4], 1

</llo_original>
